<compile_context>
chip_gen: v5e
topology: v5e:2x2
jax: 0.10.0
libtpu: 0.0.40
codegen_flags: <defaults>
</compile_context>

<pallas_src>
import jax
import jax.numpy as jnp
from jax import lax
from jax.experimental import pallas as pl
from jax.experimental.pallas import tpu as pltpu

HIDDEN = 128   # nn.Linear(in_chan, 128)
QKV = 384      # nn.Linear(128, 384)


def _softmax(z):
    m = jnp.max(z, axis=-1, keepdims=True)
    e = jnp.exp(z - m)
    # approx reciprocal lands on the EUP slot; the multiply co-issues on the VPU.
    return e * pl.reciprocal(jnp.sum(e, axis=-1, keepdims=True), approx=True)


def _qkv_kernel(tea_ref, stu_ref, wtt_ref, wts_ref, bt_ref, wqk_ref, bqk_ref,
                wvw_ref, bvw_ref, q_ref, k_ref, vw_ref):
    # tea/stu: [TQ, C] f32 row tile.  MXU operands are bf16; accumulation / biases are f32.
    tea_prob = _softmax(tea_ref[...])
    stu_prob = _softmax(stu_ref[...])

    # token(cat([tea_prob, stu_prob], 1)) == tea_prob @ Wt_tea + stu_prob @ Wt_stu + bt
    h = (jnp.dot(tea_prob.astype(jnp.bfloat16), wtt_ref[...],
                 preferred_element_type=jnp.float32)
         + jnp.dot(stu_prob.astype(jnp.bfloat16), wts_ref[...],
                   preferred_element_type=jnp.float32)
         + bt_ref[...])                                               # [TQ, 128] f32

    # Only the q/k columns of the qkv Linear are needed; the v columns are folded into vw.
    qk = (jnp.dot(h.astype(jnp.bfloat16), wqk_ref[...],
                  preferred_element_type=jnp.float32) + bqk_ref[...])  # [TQ, 256] f32
    q_ref[...] = qk[:, :HIDDEN].astype(q_ref.dtype)
    k_ref[...] = qk[:, HIDDEN:].astype(k_ref.dtype)

    # Folded value head: vw[r] = h[r,:] . (Wq_v @ wf^T) + bq_v . wf, emitted as a
    # lane-dense [1, TQ] row via an M=1 MXU matvec (no sublane->lane transpose needed).
    vw_ref[...] = (lax.dot_general(wvw_ref[...], h,
                                   dimension_numbers=(((1,), (1,)), ((), ())),
                                   preferred_element_type=jnp.float32)
                   + bvw_ref[...])


def _attn_loss_kernel(q_ref, k_ref, vw_ref, tea_ref, stu_ref, bf_ref,
                      T_ref, kd_ref, acc_ref):
    # q: [TQ, 128] bf16 row tile (resident across kv); k: [TKV, 128] bf16 kv tile;
    # vw: [1, TKV] f32; tea/stu: [C, TQ] f32 (classes on sublanes, rows on lanes).
    kv = pl.program_id(1)

    @pl.when(kv == 0)
    def _():
        acc_ref[...] = jnp.zeros_like(acc_ref)

    # att_scores = sigmoid(q @ k^T) for this (row-tile, kv-tile) pair.
    scores = lax.dot_general(q_ref[...], k_ref[...],
                             dimension_numbers=(((1,), (1,)), ((), ())),
                             preferred_element_type=jnp.float32)       # [TQ, TKV] f32
    scores = jax.nn.sigmoid(scores)
    # TODO(synk): nn.Dropout(0.1) on att_scores is stochastic; eval-mode identity here.

    # fc_out folded into v:  out += scores @ vw  (rank-1), as an M=1 MXU matvec so the
    # partial per-row sums stay lane-dense in the [1, TQ] accumulator.
    acc_ref[...] += lax.dot_general(vw_ref[...], scores,
                                    dimension_numbers=(((1,), (1,)), ((), ())),
                                    preferred_element_type=jnp.float32)  # [1, TQ]

    @pl.when(kv == pl.num_programs(1) - 1)
    def _():
        out = acc_ref[...] + bf_ref[...]                       # [1, TQ]
        # GradientReversal is identity in forward; T = 1 + (tanh(out)+1)/2 * (10-1).
        T = 1.0 + (jnp.tanh(out) + 1.0) * 4.5
        T_ref[...] = T

        inv_T = 1.0 / T                                        # [1, TQ]
        tea = tea_ref[...] * inv_T                             # [C, TQ]
        stu = stu_ref[...] * inv_T

        # kd = kl_div(log_softmax(stu/T, cls), softmax(tea/T, cls), 'none').sum(cls)
        # Single exp pass per tensor; tgt = e/denom reuses e (no second exp, no log(0)).
        mt = jnp.max(tea, axis=0, keepdims=True)
        ts = tea - mt
        te = jnp.exp(ts)
        td = jnp.sum(te, axis=0, keepdims=True)
        log_tgt = ts - jnp.log(td)
        tgt = te * pl.reciprocal(td, approx=True)

        ms = jnp.max(stu, axis=0, keepdims=True)
        ss = stu - ms
        sd = jnp.sum(jnp.exp(ss), axis=0, keepdims=True)
        log_q = ss - jnp.log(sd)

        kd_ref[...] = jnp.sum(tgt * (log_tgt - log_q), axis=0, keepdims=True)  # [1, TQ]


def _round_up(x, m):
    return ((x + m - 1) // m) * m


def _tiling(n):
    """(n_pad, tq1, tq2, tkv): tiles are either the full padded batch or multiples of 128
    lanes so the lane-dense (1, tile) blocks stay legal; n is zero-padded to n_pad."""
    if n <= 256:
        n_pad = _round_up(n, 8)
        return n_pad, n_pad, n_pad, n_pad
    n_pad = _round_up(n, 256)
    tq2 = 256                                                    # kernel-2 row tile
    tkv = 512 if n_pad % 512 == 0 else 256                       # kernel-2 kv tile
    tq1 = 512 if (n_pad % 512 == 0 and n_pad >= 1024) else 256   # kernel-1 row tile
    return n_pad, tq1, tq2, tkv


def _vmem_need_bytes(c, tq1, tq2, tkv):
    """Rough per-grid-step VMEM footprint (x2 pipeline buffers on blocked operands)."""
    f4, b2 = 4, 2
    k1 = (2 * (2 * tq1 * c * f4)                         # tea/stu input blocks
          + 2 * (2 * tq1 * HIDDEN * b2 + tq1 * f4)       # q/k/vw output blocks
          + 2 * (2 * c * HIDDEN * b2 + 2 * HIDDEN * HIDDEN * b2
                 + 4 * HIDDEN * f4 + 2 * f4)             # weights / biases
          + 2 * tq1 * c * f4                             # softmax temps
          + 3 * tq1 * HIDDEN * f4)                       # h, qk temps
    k2 = (2 * (tq2 * HIDDEN * b2 + tkv * HIDDEN * b2 + tkv * f4)   # q, k, vw blocks
          + 2 * (2 * c * tq2 * f4)                       # tea^T / stu^T blocks
          + 2 * (2 * tq2 * f4)                           # T / kd output blocks
          + tq2 * tkv * f4                               # scores temp
          + 8 * tq2 * f4                                 # accumulator scratch
          + 4 * c * tq2 * f4)                            # KL temps
    return max(k1, k2)


def _vmem_limit_bytes(need):
    try:  # chip-aware ceiling: ~128 MiB physical on v5e/v6e, 64 MiB on v7x
        cap = int(pltpu.get_tpu_info().vmem_capacity_bytes)
    except Exception:
        cap = 64 << 20
    ceiling = (cap // 8) * 7          # headroom for compiler-internal scratch
    return int(min(max(2 * need, 32 << 20), ceiling))


def init_params(key, in_chan):
    """Deterministic PyTorch-style Linear init (uniform(-1/sqrt(fan_in), 1/sqrt(fan_in))).
    Weights stored pre-transposed to [in, out]; biases as [1, out] rows."""
    k1, k2, k3, k4, k5, k6 = jax.random.split(key, 6)

    def unif(k, shape, fan_in):
        bound = 1.0 / float(fan_in) ** 0.5
        return jax.random.uniform(k, shape, jnp.float32, -bound, bound)

    wt = unif(k1, (in_chan, HIDDEN), in_chan)   # token
    bt = unif(k2, (1, HIDDEN), in_chan)
    wq = unif(k3, (HIDDEN, QKV), HIDDEN)        # qkv
    bq = unif(k4, (1, QKV), HIDDEN)
    wf = unif(k5, (1, HIDDEN), HIDDEN)          # fc_out weight as a row
    bf = unif(k6, (1, 1), HIDDEN)
    return wt, bt, wq, bq, wf, bf


def mlp_loss(tea_logit, stu_logit, gt, decay_value, params):
    # gt and decay_value do not affect the forward value (decay_value only scales grads).
    del gt, decay_value
    n, c = tea_logit.shape
    wt, bt, wq, bq, wf, bf = params

    # --- one-off parameter folding / layout prep (tiny XLA ops) ---
    wt_tea = wt[:c].astype(jnp.bfloat16)
    wt_stu = wt[c:].astype(jnp.bfloat16)
    wqk = wq[:, :2 * HIDDEN].astype(jnp.bfloat16)
    bqk = bq[:, :2 * HIDDEN]
    wq_v = wq[:, 2 * HIDDEN:]
    bq_v = bq[:, 2 * HIDDEN:]
    # fc_out folded into the value head: vw = v @ wf^T = h @ (Wq_v @ wf^T) + bq_v . wf
    wvw = (wq_v @ wf[0]).reshape(1, HIDDEN)
    bvw = jnp.sum(bq_v * wf).reshape(1, 1)

    n_pad, tq1, tq2, tkv = _tiling(n)
    if n_pad != n:
        pad = ((0, n_pad - n), (0, 0))
        tea_p = jnp.pad(tea_logit, pad)
        stu_p = jnp.pad(stu_logit, pad)
    else:
        tea_p, stu_p = tea_logit, stu_logit

    vlim = _vmem_limit_bytes(_vmem_need_bytes(c, tq1, tq2, tkv))
    cparams1 = pltpu.CompilerParams(dimension_semantics=("parallel",),
                                    vmem_limit_bytes=vlim)
    cparams2 = pltpu.CompilerParams(dimension_semantics=("parallel", "arbitrary"),
                                    vmem_limit_bytes=vlim)

    # ---- kernel 1: softmax + token + q/k + folded value head (row-parallel) ----
    q, k, vw = pl.pallas_call(
        _qkv_kernel,
        out_shape=(jax.ShapeDtypeStruct((n_pad, HIDDEN), jnp.bfloat16),
                   jax.ShapeDtypeStruct((n_pad, HIDDEN), jnp.bfloat16),
                   jax.ShapeDtypeStruct((1, n_pad), jnp.float32)),
        grid_spec=pltpu.PrefetchScalarGridSpec(
            num_scalar_prefetch=0,
            grid=(n_pad // tq1,),
            in_specs=[
                pl.BlockSpec((tq1, c), lambda i: (i, 0)),          # tea rows
                pl.BlockSpec((tq1, c), lambda i: (i, 0)),          # stu rows
                pl.BlockSpec((c, HIDDEN), lambda i: (0, 0)),       # Wt (tea half)
                pl.BlockSpec((c, HIDDEN), lambda i: (0, 0)),       # Wt (stu half)
                pl.BlockSpec((1, HIDDEN), lambda i: (0, 0)),       # bt
                pl.BlockSpec((HIDDEN, 2 * HIDDEN), lambda i: (0, 0)),  # Wq (q,k cols)
                pl.BlockSpec((1, 2 * HIDDEN), lambda i: (0, 0)),   # bq (q,k)
                pl.BlockSpec((1, HIDDEN), lambda i: (0, 0)),       # Wq_v @ wf^T row
                pl.BlockSpec((1, 1), lambda i: (0, 0)),            # bq_v . wf
            ],
            out_specs=(
                pl.BlockSpec((tq1, HIDDEN), lambda i: (i, 0)),     # q
                pl.BlockSpec((tq1, HIDDEN), lambda i: (i, 0)),     # k
                pl.BlockSpec((1, tq1), lambda i: (0, i)),          # vw (lane-dense row)
            ),
        ),
        compiler_params=cparams1,
    )(tea_p, stu_p, wt_tea, wt_stu, bt, wqk, bqk, wvw, bvw)

    # Padded rows must never contribute to the attention sum: zero their vw entries.
    if n_pad != n:
        vw = jnp.where(jnp.arange(n_pad)[None, :] < n, vw, 0.0)

    # Class-major copies for kernel 2 so all per-row results stay lane-dense.
    tea_t = tea_p.T          # [C, n_pad]
    stu_t = stu_p.T

    # ---- kernel 2: sigmoid attention + T + per-row KL (rows parallel, kv tiled) ----
    T_row, kd_row = pl.pallas_call(
        _attn_loss_kernel,
        out_shape=(jax.ShapeDtypeStruct((1, n_pad), jnp.float32),
                   jax.ShapeDtypeStruct((1, n_pad), jnp.float32)),
        grid_spec=pltpu.PrefetchScalarGridSpec(
            num_scalar_prefetch=0,
            grid=(n_pad // tq2, n_pad // tkv),
            in_specs=[
                pl.BlockSpec((tq2, HIDDEN), lambda i, j: (i, 0)),  # q rows (resident over kv)
                pl.BlockSpec((tkv, HIDDEN), lambda i, j: (j, 0)),  # k kv tile
                pl.BlockSpec((1, tkv), lambda i, j: (0, j)),       # vw kv tile
                pl.BlockSpec((c, tq2), lambda i, j: (0, i)),       # tea^T cols for this row tile
                pl.BlockSpec((c, tq2), lambda i, j: (0, i)),       # stu^T cols
                pl.BlockSpec((1, 1), lambda i, j: (0, 0)),         # bf
            ],
            out_specs=(
                pl.BlockSpec((1, tq2), lambda i, j: (0, i)),       # T (lane-dense)
                pl.BlockSpec((1, tq2), lambda i, j: (0, i)),       # kd (lane-dense)
            ),
            scratch_shapes=[pltpu.VMEM((1, tq2), jnp.float32)],    # out accumulator
        ),
        compiler_params=cparams2,
    )(q, k, vw, tea_t, stu_t, bf)

    T = T_row[0, :n].reshape(n, 1)
    kd = kd_row[0, :n]
    # PyTorch broadcast loss: mean_{i,j}(kd[j] * T[i]^2) == (sum T^2)(sum kd) / N^2.
    loss = (jnp.sum(T * T) * jnp.sum(kd)) / jnp.float32(n * n)
    return loss, T


if __name__ == "__main__":
    key = jax.random.PRNGKey(0)
    N, C = 8, 4                 # batch of 8 samples, 4 classes
    in_chan = 2 * C             # MLP_T input = cat([tea_prob, stu_prob], dim=1)
    k_tea, k_stu, k_gt, k_params = jax.random.split(key, 4)
    tea_logit = jax.random.normal(k_tea, (N, C), jnp.float32)
    stu_logit = jax.random.normal(k_stu, (N, C), jnp.float32)
    gt = jax.random.randint(k_gt, (N,), 0, C)           # unused by the forward value
    decay_value = 1.0                                    # only affects GRL backward
    params = init_params(k_params, in_chan)

    loss, T = mlp_loss(tea_logit, stu_logit, gt, decay_value, params)
    jax.block_until_ready((loss, T))
    print("KERNEL_OK")
</pallas_src>

<mosaic_0001>
module attributes {stable_mosaic.version = 11 : i64} {
  func.func @_qkv_kernel(%arg0: i32, %arg1: memref<8x4xf32, #tpu.memory_space<vmem>>, %arg2: memref<8x4xf32, #tpu.memory_space<vmem>>, %arg3: memref<4x128xbf16, #tpu.memory_space<vmem>>, %arg4: memref<4x128xbf16, #tpu.memory_space<vmem>>, %arg5: memref<1x128xf32, #tpu.memory_space<vmem>>, %arg6: memref<128x256xbf16, #tpu.memory_space<vmem>>, %arg7: memref<1x256xf32, #tpu.memory_space<vmem>>, %arg8: memref<1x128xf32, #tpu.memory_space<vmem>>, %arg9: memref<1x1xf32, #tpu.memory_space<vmem>>, %arg10: memref<8x128xbf16, #tpu.memory_space<vmem>>, %arg11: memref<8x128xbf16, #tpu.memory_space<vmem>>, %arg12: memref<1x8xf32, #tpu.memory_space<vmem>>) attributes {dimension_semantics = [#tpu.dimension_semantics<parallel>], iteration_bounds = array<i64: 1>, scalar_prefetch = 0 : i64, scratch_operands = 0 : i64, tpu.core_type = #tpu.core_type<tc>, window_params = [{transform_indices = @transform_0, window_bounds = array<i64: 8, 4>}, {transform_indices = @transform_1, window_bounds = array<i64: 8, 4>}, {pipeline_mode = #tpu.pipeline_mode<synchronous>, transform_indices = @transform_2, window_bounds = array<i64: 4, 128>}, {pipeline_mode = #tpu.pipeline_mode<synchronous>, transform_indices = @transform_3, window_bounds = array<i64: 4, 128>}, {pipeline_mode = #tpu.pipeline_mode<synchronous>, transform_indices = @transform_4, window_bounds = array<i64: 1, 128>}, {pipeline_mode = #tpu.pipeline_mode<synchronous>, transform_indices = @transform_5, window_bounds = array<i64: 128, 256>}, {pipeline_mode = #tpu.pipeline_mode<synchronous>, transform_indices = @transform_6, window_bounds = array<i64: 1, 256>}, {pipeline_mode = #tpu.pipeline_mode<synchronous>, transform_indices = @transform_7, window_bounds = array<i64: 1, 128>}, {pipeline_mode = #tpu.pipeline_mode<synchronous>, transform_indices = @transform_8, window_bounds = array<i64: 1, 1>}, {transform_indices = @transform_9, window_bounds = array<i64: 8, 128>}, {transform_indices = @transform_10, window_bounds = array<i64: 8, 128>}, {transform_indices = @transform_11, window_bounds = array<i64: 1, 8>}]} {
    %c0 = arith.constant 0 : index
    %c0_0 = arith.constant 0 : index
    %0 = vector.load %arg1[%c0, %c0_0] : memref<8x4xf32, #tpu.memory_space<vmem>>, vector<8x4xf32>
    %cst = arith.constant dense<0xFF800000> : vector<8xf32>
    %1 = vector.multi_reduction <maximumf>, %0, %cst [1] : vector<8x4xf32> to vector<8xf32>
    %2 = vector.shape_cast %1 : vector<8xf32> to vector<8x1xf32>
    %3 = vector.broadcast %2 : vector<8x1xf32> to vector<8x4xf32>
    %4 = arith.subf %0, %3 : vector<8x4xf32>
    %5 = math.exp %4 : vector<8x4xf32>
    %cst_1 = arith.constant dense<0.000000e+00> : vector<8xf32>
    %6 = vector.multi_reduction <add>, %5, %cst_1 [1] : vector<8x4xf32> to vector<8xf32>
    %7 = vector.shape_cast %6 : vector<8xf32> to vector<8x1xf32>
    %8 = tpu.reciprocal %7 {approx = true} : vector<8x1xf32> -> vector<8x1xf32>
    %9 = vector.broadcast %8 : vector<8x1xf32> to vector<8x4xf32>
    %10 = arith.mulf %5, %9 : vector<8x4xf32>
    %c0_2 = arith.constant 0 : index
    %c0_3 = arith.constant 0 : index
    %11 = vector.load %arg2[%c0_2, %c0_3] : memref<8x4xf32, #tpu.memory_space<vmem>>, vector<8x4xf32>
    %cst_4 = arith.constant dense<0xFF800000> : vector<8xf32>
    %12 = vector.multi_reduction <maximumf>, %11, %cst_4 [1] : vector<8x4xf32> to vector<8xf32>
    %13 = vector.shape_cast %12 : vector<8xf32> to vector<8x1xf32>
    %14 = vector.broadcast %13 : vector<8x1xf32> to vector<8x4xf32>
    %15 = arith.subf %11, %14 : vector<8x4xf32>
    %16 = math.exp %15 : vector<8x4xf32>
    %cst_5 = arith.constant dense<0.000000e+00> : vector<8xf32>
    %17 = vector.multi_reduction <add>, %16, %cst_5 [1] : vector<8x4xf32> to vector<8xf32>
    %18 = vector.shape_cast %17 : vector<8xf32> to vector<8x1xf32>
    %19 = tpu.reciprocal %18 {approx = true} : vector<8x1xf32> -> vector<8x1xf32>
    %20 = vector.broadcast %19 : vector<8x1xf32> to vector<8x4xf32>
    %21 = arith.mulf %16, %20 : vector<8x4xf32>
    %22 = arith.truncf %10 : vector<8x4xf32> to vector<8x4xbf16>
    %c0_6 = arith.constant 0 : index
    %c0_7 = arith.constant 0 : index
    %23 = vector.load %arg3[%c0_6, %c0_7] : memref<4x128xbf16, #tpu.memory_space<vmem>>, vector<4x128xbf16>
    %cst_8 = arith.constant dense<0.000000e+00> : vector<8x128xf32>
    %24 = tpu.matmul %22, %23, %cst_8 {dimension_numbers = #tpu.dot_dimension_numbers<[1], [0], [0], [1], [0, 0, 1, 1], [], []>} : vector<8x4xbf16>, vector<4x128xbf16>, vector<8x128xf32> -> vector<8x128xf32>
    %25 = arith.truncf %21 : vector<8x4xf32> to vector<8x4xbf16>
    %c0_9 = arith.constant 0 : index
    %c0_10 = arith.constant 0 : index
    %26 = vector.load %arg4[%c0_9, %c0_10] : memref<4x128xbf16, #tpu.memory_space<vmem>>, vector<4x128xbf16>
    %cst_11 = arith.constant dense<0.000000e+00> : vector<8x128xf32>
    %27 = tpu.matmul %25, %26, %cst_11 {dimension_numbers = #tpu.dot_dimension_numbers<[1], [0], [0], [1], [0, 0, 1, 1], [], []>} : vector<8x4xbf16>, vector<4x128xbf16>, vector<8x128xf32> -> vector<8x128xf32>
    %28 = arith.addf %24, %27 : vector<8x128xf32>
    %c0_12 = arith.constant 0 : index
    %c0_13 = arith.constant 0 : index
    %29 = vector.load %arg5[%c0_12, %c0_13] : memref<1x128xf32, #tpu.memory_space<vmem>>, vector<1x128xf32>
    %30 = vector.broadcast %29 : vector<1x128xf32> to vector<8x128xf32>
    %31 = arith.addf %28, %30 : vector<8x128xf32>
    %32 = arith.truncf %31 : vector<8x128xf32> to vector<8x128xbf16>
    %c0_14 = arith.constant 0 : index
    %c0_15 = arith.constant 0 : index
    %33 = vector.load %arg6[%c0_14, %c0_15] : memref<128x256xbf16, #tpu.memory_space<vmem>>, vector<128x256xbf16>
    %cst_16 = arith.constant dense<0.000000e+00> : vector<8x256xf32>
    %34 = tpu.matmul %32, %33, %cst_16 {dimension_numbers = #tpu.dot_dimension_numbers<[1], [0], [0], [1], [0, 0, 1, 1], [], []>} : vector<8x128xbf16>, vector<128x256xbf16>, vector<8x256xf32> -> vector<8x256xf32>
    %c0_17 = arith.constant 0 : index
    %c0_18 = arith.constant 0 : index
    %35 = vector.load %arg7[%c0_17, %c0_18] : memref<1x256xf32, #tpu.memory_space<vmem>>, vector<1x256xf32>
    %36 = vector.broadcast %35 : vector<1x256xf32> to vector<8x256xf32>
    %37 = arith.addf %34, %36 : vector<8x256xf32>
    %38 = vector.extract_strided_slice %37 {offsets = [0, 0], sizes = [8, 128], strides = [1, 1]} : vector<8x256xf32> to vector<8x128xf32>
    %39 = arith.truncf %38 : vector<8x128xf32> to vector<8x128xbf16>
    %c0_19 = arith.constant 0 : index
    %c0_20 = arith.constant 0 : index
    %40 = vector.load %arg10[%c0_19, %c0_20] : memref<8x128xbf16, #tpu.memory_space<vmem>>, vector<8x128xbf16>
    tpu.vector_store %arg10[%c0_19, %c0_20], %39 {strides = array<i32>} : memref<8x128xbf16, #tpu.memory_space<vmem>>, vector<8x128xbf16>,
    %41 = vector.extract_strided_slice %37 {offsets = [0, 128], sizes = [8, 128], strides = [1, 1]} : vector<8x256xf32> to vector<8x128xf32>
    %42 = arith.truncf %41 : vector<8x128xf32> to vector<8x128xbf16>
    %c0_21 = arith.constant 0 : index
    %c0_22 = arith.constant 0 : index
    %43 = vector.load %arg11[%c0_21, %c0_22] : memref<8x128xbf16, #tpu.memory_space<vmem>>, vector<8x128xbf16>
    tpu.vector_store %arg11[%c0_21, %c0_22], %42 {strides = array<i32>} : memref<8x128xbf16, #tpu.memory_space<vmem>>, vector<8x128xbf16>,
    %c0_23 = arith.constant 0 : index
    %c0_24 = arith.constant 0 : index
    %44 = vector.load %arg8[%c0_23, %c0_24] : memref<1x128xf32, #tpu.memory_space<vmem>>, vector<1x128xf32>
    %cst_25 = arith.constant dense<0.000000e+00> : vector<1x8xf32>
    %45 = tpu.matmul %44, %31, %cst_25 {dimension_numbers = #tpu.dot_dimension_numbers<[1], [1], [0], [0], [0, 0, 1, 0], [], []>} : vector<1x128xf32>, vector<8x128xf32>, vector<1x8xf32> -> vector<1x8xf32>
    %c0_26 = arith.constant 0 : index
    %c0_27 = arith.constant 0 : index
    %46 = vector.load %arg9[%c0_26, %c0_27] : memref<1x1xf32, #tpu.memory_space<vmem>>, vector<1x1xf32>
    %47 = vector.broadcast %46 : vector<1x1xf32> to vector<1x8xf32>
    %48 = arith.addf %45, %47 : vector<1x8xf32>
    %c0_28 = arith.constant 0 : index
    %c0_29 = arith.constant 0 : index
    %49 = vector.load %arg12[%c0_28, %c0_29] : memref<1x8xf32, #tpu.memory_space<vmem>>, vector<1x8xf32>
    tpu.vector_store %arg12[%c0_28, %c0_29], %48 {strides = array<i32>} : memref<1x8xf32, #tpu.memory_space<vmem>>, vector<1x8xf32>,
    return
  }
  func.func @transform_0(%arg0: i32) -> (i32, i32) {
    %c0_i32 = arith.constant 0 : i32
    %c0_i32_0 = arith.constant 0 : i32
    return %arg0, %c0_i32 : i32, i32
  }
  func.func @transform_1(%arg0: i32) -> (i32, i32) {
    %c0_i32 = arith.constant 0 : i32
    %c0_i32_0 = arith.constant 0 : i32
    return %arg0, %c0_i32 : i32, i32
  }
  func.func @transform_2(%arg0: i32) -> (i32, i32) {
    %c0_i32 = arith.constant 0 : i32
    %c0_i32_0 = arith.constant 0 : i32
    %c0_i32_1 = arith.constant 0 : i32
    return %c0_i32, %c0_i32_0 : i32, i32
  }
  func.func @transform_3(%arg0: i32) -> (i32, i32) {
    %c0_i32 = arith.constant 0 : i32
    %c0_i32_0 = arith.constant 0 : i32
    %c0_i32_1 = arith.constant 0 : i32
    return %c0_i32, %c0_i32_0 : i32, i32
  }
  func.func @transform_4(%arg0: i32) -> (i32, i32) {
    %c0_i32 = arith.constant 0 : i32
    %c0_i32_0 = arith.constant 0 : i32
    %c0_i32_1 = arith.constant 0 : i32
    return %c0_i32, %c0_i32_0 : i32, i32
  }
  func.func @transform_5(%arg0: i32) -> (i32, i32) {
    %c0_i32 = arith.constant 0 : i32
    %c0_i32_0 = arith.constant 0 : i32
    %c0_i32_1 = arith.constant 0 : i32
    return %c0_i32, %c0_i32_0 : i32, i32
  }
  func.func @transform_6(%arg0: i32) -> (i32, i32) {
    %c0_i32 = arith.constant 0 : i32
    %c0_i32_0 = arith.constant 0 : i32
    %c0_i32_1 = arith.constant 0 : i32
    return %c0_i32, %c0_i32_0 : i32, i32
  }
  func.func @transform_7(%arg0: i32) -> (i32, i32) {
    %c0_i32 = arith.constant 0 : i32
    %c0_i32_0 = arith.constant 0 : i32
    %c0_i32_1 = arith.constant 0 : i32
    return %c0_i32, %c0_i32_0 : i32, i32
  }
  func.func @transform_8(%arg0: i32) -> (i32, i32) {
    %c0_i32 = arith.constant 0 : i32
    %c0_i32_0 = arith.constant 0 : i32
    %c0_i32_1 = arith.constant 0 : i32
    return %c0_i32, %c0_i32_0 : i32, i32
  }
  func.func @transform_9(%arg0: i32) -> (i32, i32) {
    %c0_i32 = arith.constant 0 : i32
    %c0_i32_0 = arith.constant 0 : i32
    return %arg0, %c0_i32 : i32, i32
  }
  func.func @transform_10(%arg0: i32) -> (i32, i32) {
    %c0_i32 = arith.constant 0 : i32
    %c0_i32_0 = arith.constant 0 : i32
    return %arg0, %c0_i32 : i32, i32
  }
  func.func @transform_11(%arg0: i32) -> (i32, i32) {
    %c0_i32 = arith.constant 0 : i32
    %c0_i32_0 = arith.constant 0 : i32
    return %c0_i32, %arg0 : i32, i32
  }
}

</mosaic_0001>

<llo_original>
// kernel: tpu_custom_call.1
$region0: #{tpu_custom_call.1}
  #allocation0 [shape = 'u32[]', space=smem, size = 0x4, offset = 0x4, fixed_abs, tag = 'smem constant byte address 0x4 - core index']
  #allocation1 [shape = 'u32[72,128]{1,0:T(1,128)}', space=vmem, size = 0x9000, scoped, tag = 'internal scratch']
  #allocation2 [shape = 'f32[1,1]{1,0:T(1,128)S(1)}', space=vmem, size = 0x200, scoped, tag = 'scoped memory for tpu_custom_call.1']
  %s0 = inlined_call_operand.vmem [shape: f32[8,4], index: 0, kind: input, shape index: {}]
  %s1 = inlined_call_operand.vmem [shape: f32[8,4], index: 1, kind: input, shape index: {}]
  %s2 = inlined_call_operand.vmem [shape: bf16[4,128], index: 2, kind: input, shape index: {}]
  %s3 = inlined_call_operand.vmem [shape: bf16[4,128], index: 3, kind: input, shape index: {}]
  %s4 = inlined_call_operand.vmem [shape: f32[1,128], index: 4, kind: input, shape index: {}]
  %s5 = inlined_call_operand.hbm [shape: bf16[128,256], index: 5, kind: input, shape index: {}]
  %s6 = inlined_call_operand.vmem [shape: f32[1,256], index: 6, kind: input, shape index: {}]
  %s7 = inlined_call_operand.vmem [shape: f32[1,128], index: 7, kind: input, shape index: {}]
  %s8 = inlined_call_operand.<no memory space> [shape: f32[1,1], index: 8, kind: input, shape index: {}]
  %s9 = inlined_call_operand.hbm [shape: bf16[8,128], index: 9, kind: output, shape index: {0}]
  %s10 = inlined_call_operand.hbm [shape: bf16[8,128], index: 10, kind: output, shape index: {1}]
  %s11 = inlined_call_operand.hbm [shape: f32[1,8], index: 11, kind: output, shape index: {2}]
  %12 = xla_tuple %s9, %s10, %s11
  %s13 = sld [smem:[#allocation0]]
  $region66: #{tpu_custom_call.1} parent=0
    _
  %s15 = ssub.s32 1, %s13
  %s16 = scalar_select 0, %s15, %s13
  %v17 = vstv %s8
  %18 = vst [vmem:[#allocation2] sm:$0x1] %v17
  $region1: #{tpu_custom_call.1} parent=0
    #allocation3 [shape = 'u8[65536]{0}', space=vmem, size = 0x10000, scoped, tag = 'input window, operand 5, single buffered']
    #allocation4 [shape = 's32[1]{0}', space=sflag, size = 0x4, scoped, tag = 'scoped memory for tpu_custom_call.1']
    #allocation5 [shape = 's32[1]{0}', space=sflag, size = 0x4, scoped, tag = 'scoped memory for tpu_custom_call.1']
    #allocation6 [shape = 'u8[2048]{0}', space=vmem, size = 0x800, scoped, tag = 'output window, operand 0, single buffered']
    #allocation7 [shape = 'u8[2048]{0}', space=vmem, size = 0x800, scoped, tag = 'output window, operand 1, single buffered']
    #allocation8 [shape = 's32[1]{0}', space=sflag, size = 0x4, scoped, tag = 'scoped memory for tpu_custom_call.1']
    #allocation9 [shape = 'u8[512]{0}', space=vmem, size = 0x400, scoped, tag = 'output window, operand 2, single buffered']
    %19 = vsyncpa [#allocation4], 0
    %20 = vsyncpa [#allocation5], 0
    %21 = vsyncpa [#allocation8], 0
    // Predicated region
    $region2: #{tpu_custom_call.1} parent=1 // pred_check
      _
    $region3: #{tpu_custom_call.1} parent=1 // pred_check_branch
      %23 = sbr.rel (0) target = $region5
    $region4: #{tpu_custom_call.1} parent=1 // pred_region
      _
    $region5: #{tpu_custom_call.1} parent=1 // pred_fallthru
      _
    // Predicated region
    $region6: #{tpu_custom_call.1} parent=1 // pred_check
      _
    $region7: #{tpu_custom_call.1} parent=1 // pred_check_branch
      %25 = sbr.rel (0) target = $region9
    $region8: #{tpu_custom_call.1} parent=1 // pred_region
      _
    $region9: #{tpu_custom_call.1} parent=1 // pred_fallthru
      _
    // Predicated region
    $region10: #{tpu_custom_call.1} parent=1 // pred_check
      _
    $region11: #{tpu_custom_call.1} parent=1 // pred_check_branch
      %27 = sbr.rel (0) target = $region13
    $region12: #{tpu_custom_call.1} parent=1 // pred_region
      _
    $region13: #{tpu_custom_call.1} parent=1 // pred_fallthru
      _
    // Predicated region
    $region14: #{tpu_custom_call.1} parent=1 // pred_check
      _
    $region15: #{tpu_custom_call.1} parent=1 // pred_check_branch
      %29 = sbr.rel (0) target = $region17
    $region16: #{tpu_custom_call.1} parent=1 // pred_region
      _
    $region17: #{tpu_custom_call.1} parent=1 // pred_fallthru
      _
    // Predicated region
    $region18: #{tpu_custom_call.1} parent=1 // pred_check
      _
    $region19: #{tpu_custom_call.1} parent=1 // pred_check_branch
      %31 = sbr.rel (0) target = $region21
    $region20: #{tpu_custom_call.1} parent=1 // pred_region
      _
    $region21: #{tpu_custom_call.1} parent=1 // pred_fallthru
      _
    // Predicated region
    $region22: #{tpu_custom_call.1} parent=1 // pred_check
      _
    $region23: #{tpu_custom_call.1} parent=1 // pred_check_branch
      %33 = sbr.rel (0) target = $region25
    $region24: #{tpu_custom_call.1} parent=1 // pred_region
      %35 = vsyncadd [#allocation4], 0
      %s36 = sshll.u32 %s5, 4
      %s37 = int_to_ptr.hbm [resolvable:$true] %s36
      %s38 = sshll.u32 [#allocation3], 4
      %s39 = int_to_ptr.vmem [resolvable:$true] %s38
      %44 = dma.hbm_to_vmem [thread:$0]  %s37, 2048, %s39, [#allocation4], 128, 128, 8
    $region25: #{tpu_custom_call.1} parent=1 // pred_fallthru
      _
    // Predicated region
    $region26: #{tpu_custom_call.1} parent=1 // pred_check
      _
    $region27: #{tpu_custom_call.1} parent=1 // pred_check_branch
      %46 = sbr.rel (0) target = $region29
    $region28: #{tpu_custom_call.1} parent=1 // pred_region
      _
    $region29: #{tpu_custom_call.1} parent=1 // pred_fallthru
      _
    // Predicated region
    $region30: #{tpu_custom_call.1} parent=1 // pred_check
      _
    $region31: #{tpu_custom_call.1} parent=1 // pred_check_branch
      %48 = sbr.rel (0) target = $region33
    $region32: #{tpu_custom_call.1} parent=1 // pred_region
      _
    $region33: #{tpu_custom_call.1} parent=1 // pred_fallthru
      _
    // Predicated region
    $region34: #{tpu_custom_call.1} parent=1 // pred_check
      _
    $region35: #{tpu_custom_call.1} parent=1 // pred_check_branch
      %50 = sbr.rel (0) target = $region37
    $region36: #{tpu_custom_call.1} parent=1 // pred_region
      _
    $region37: #{tpu_custom_call.1} parent=1 // pred_fallthru
      _
    // Predicated region
    $region38: #{tpu_custom_call.1} parent=1 // pred_check
      _
    $region39: #{tpu_custom_call.1} parent=1 // pred_check_branch
      %52 = sbr.rel (0) target = $region41
    $region40: #{tpu_custom_call.1} parent=1 // pred_region
      %54 = dma.done [#allocation4], 2048
    $region41: #{tpu_custom_call.1} parent=1 // pred_fallthru
      _
    %v56 = vld [vmem:[%s0] sm:$0xff]
    %vm57 = vcmask 31744
    %v58 = vsel %vm57, %v56, -inf
    %59 = vmax.xlane.f32.xlu0 %v58
    %v60 = vpop.xlane.xlu0 %59
    %v61 = vsub.f32 %v56, %v60
    %v62 = vmul.f32 %v61, 1.442695
    %v63 = vpow.pop %v62
    %v64 = vsel %vm57, %v63, 0.0
    %65 = vadd.xlane.f32.xlu0 %v64
    %v66 = vpop.xlane.xlu0 %65
    %v67 = vrcp.pop %v66
    %v68 = vmul.f32 %v63, %v67
    %v69 = vld [vmem:[%s1] sm:$0xff]
    %v70 = vsel %vm57, %v69, -inf
    %71 = vmax.xlane.f32.xlu0 %v70
    %v72 = vpop.xlane.xlu0 %71
    %v73 = vsub.f32 %v69, %v72
    %v74 = vmul.f32 %v73, 1.442695
    %v75 = vpow.pop %v74
    %v76 = vsel %vm57, %v75, 0.0
    %77 = vadd.xlane.f32.xlu0 %v76
    %v78 = vpop.xlane.xlu0 %77
    %v79 = vrcp.pop %v78
    %v80 = vmul.f32 %v75, %v79
    %v81 = vpack.c.bf16 %v68, %v68
    %v82 = vld [vmem:[%s2] sm:$0x3]
    %v83 = vpack.c.bf16 %v80, %v80
    %v84 = vld [vmem:[%s3] sm:$0x3]
    %v86 = vsel %vm57, %v83, 0
    %vm88 = vcmask 1041408
    %v90 = vsel %vm88, %v84, 0
    %92 = vmatpush.bf16.msra.mxu0 0
    %93 = vmatpush.bf16.msra.mxu0 0
    %94 = vmatpush.bf16.msra.mxu0 0
    %95 = vmatpush.bf16.msra.mxu0 0
    %96 = vmatpush.bf16.msra.mxu0 0
    %97 = vmatpush.bf16.msra.mxu0 0
    %98 = vmatpush.bf16.msra.mxu0 0
    %99 = vmatpush.bf16.msra.mxu0 %v90
    %100 = vmatmul.bf16.gmra.mxu0 %v86
    %v101 = vpop.f32.mrf.mxu0
    %v102 = vadd.f32 0.0, %v101
    %v103 = vpop.f32.mrf.mxu0
    %104 = vdwg.mxu0
    %v106 = vsel %vm57, %v81, 0
    %v109 = vsel %vm88, %v82, 0
    %111 = vmatpush.bf16.msra.mxu0 0
    %112 = vmatpush.bf16.msra.mxu0 0
    %113 = vmatpush.bf16.msra.mxu0 0
    %114 = vmatpush.bf16.msra.mxu0 0
    %115 = vmatpush.bf16.msra.mxu0 0
    %116 = vmatpush.bf16.msra.mxu0 0
    %117 = vmatpush.bf16.msra.mxu0 0
    %118 = vmatpush.bf16.msra.mxu0 %v109
    %119 = vmatmul.bf16.gmra.mxu0 %v106
    %v120 = vpop.f32.mrf.mxu0
    %v121 = vadd.f32 %v102, %v120
    %v122 = vpop.f32.mrf.mxu0
    %123 = vdwg.mxu0
    %v124 = vld [vmem:[%s4] sm:$0x1]
    %v126 = vperm.slane %v124, 0
    %v128 = vadd.f32 %v121, %v126
    %v129 = vpack.c.bf16 %v128, %v128
    %v130 = vld [vmem:[#allocation3] sm:$0xff]
    %v131 = vld [vmem:[#allocation3 + $0x8] sm:$0xff]
    %v132 = vld [vmem:[#allocation3 + $0x10] sm:$0xff]
    %v133 = vld [vmem:[#allocation3 + $0x18] sm:$0xff]
    %v134 = vld [vmem:[#allocation3 + $0x20] sm:$0xff]
    %v135 = vld [vmem:[#allocation3 + $0x28] sm:$0xff]
    %v136 = vld [vmem:[#allocation3 + $0x30] sm:$0xff]
    %v137 = vld [vmem:[#allocation3 + $0x38] sm:$0xff]
    %v138 = vld [vmem:[#allocation3 + $0x40] sm:$0xff]
    %v139 = vld [vmem:[#allocation3 + $0x48] sm:$0xff]
    %v140 = vld [vmem:[#allocation3 + $0x50] sm:$0xff]
    %v141 = vld [vmem:[#allocation3 + $0x58] sm:$0xff]
    %v142 = vld [vmem:[#allocation3 + $0x60] sm:$0xff]
    %v143 = vld [vmem:[#allocation3 + $0x68] sm:$0xff]
    %v144 = vld [vmem:[#allocation3 + $0x70] sm:$0xff]
    %v145 = vld [vmem:[#allocation3 + $0x78] sm:$0xff]
    %v146 = vld [vmem:[%s6] sm:$0x3]
    %v148 = vperm.slane %v146, 0
    %v149 = vperm.slane %v146, 1
    %v168 = vunpack.c.l.b16 %v130
    %v169 = vunpack.c.h.b16 %v130
    %v170 = vunpack.c.l.b16 %v131
    %v171 = vunpack.c.h.b16 %v131
    %v172 = vunpack.c.l.b16 %v132
    %v173 = vunpack.c.h.b16 %v132
    %v174 = vunpack.c.l.b16 %v133
    %v175 = vunpack.c.h.b16 %v133
    %v176 = vunpack.c.l.b16 %v134
    %v177 = vunpack.c.h.b16 %v134
    %v178 = vunpack.c.l.b16 %v135
    %v179 = vunpack.c.h.b16 %v135
    %v180 = vunpack.c.l.b16 %v136
    %v181 = vunpack.c.h.b16 %v136
    %v182 = vunpack.c.l.b16 %v137
    %v183 = vunpack.c.h.b16 %v137
    %v184 = vunpack.c.l.b16 %v138
    %v185 = vunpack.c.h.b16 %v138
    %v186 = vunpack.c.l.b16 %v139
    %v187 = vunpack.c.h.b16 %v139
    %v188 = vunpack.c.l.b16 %v140
    %v189 = vunpack.c.h.b16 %v140
    %v190 = vunpack.c.l.b16 %v141
    %v191 = vunpack.c.h.b16 %v141
    %v192 = vunpack.c.l.b16 %v142
    %v193 = vunpack.c.h.b16 %v142
    %v194 = vunpack.c.l.b16 %v143
    %v195 = vunpack.c.h.b16 %v143
    %v196 = vunpack.c.l.b16 %v144
    %v197 = vunpack.c.h.b16 %v144
    %v198 = vunpack.c.l.b16 %v145
    %v199 = vunpack.c.h.b16 %v145
    %v200 = vpack.c.b16 %v170, %v168
    %v201 = vpack.c.b16 %v171, %v169
    %v202 = vpack.c.b16 %v174, %v172
    %v203 = vpack.c.b16 %v175, %v173
    %v204 = vpack.c.b16 %v178, %v176
    %v205 = vpack.c.b16 %v179, %v177
    %v206 = vpack.c.b16 %v182, %v180
    %v207 = vpack.c.b16 %v183, %v181
    %v208 = vpack.c.b16 %v186, %v184
    %v209 = vpack.c.b16 %v187, %v185
    %v210 = vpack.c.b16 %v190, %v188
    %v211 = vpack.c.b16 %v191, %v189
    %v212 = vpack.c.b16 %v194, %v192
    %v213 = vpack.c.b16 %v195, %v193
    %v214 = vpack.c.b16 %v198, %v196
    %v215 = vpack.c.b16 %v199, %v197
    %232 = vmatpush.bf16.msra.mxu0 %v214
    %233 = vmatpush.bf16.msra.mxu0 %v212
    %234 = vmatpush.bf16.msra.mxu0 %v210
    %235 = vmatpush.bf16.msra.mxu0 %v208
    %236 = vmatpush.bf16.msra.mxu0 %v206
    %237 = vmatpush.bf16.msra.mxu0 %v204
    %238 = vmatpush.bf16.msra.mxu0 %v202
    %239 = vmatpush.bf16.msra.mxu0 %v200
    %240 = vmatmul.bf16.gmra.mxu0 %v129
    %v241 = vpop.f32.mrf.mxu0
    %v242 = vadd.f32 %v148, %v241
    %v243 = vpop.f32.mrf.mxu0
    %244 = vdwg.mxu0
    %245 = vmatpush.bf16.msra.mxu0 %v215
    %246 = vmatpush.bf16.msra.mxu0 %v213
    %247 = vmatpush.bf16.msra.mxu0 %v211
    %248 = vmatpush.bf16.msra.mxu0 %v209
    %249 = vmatpush.bf16.msra.mxu0 %v207
    %250 = vmatpush.bf16.msra.mxu0 %v205
    %251 = vmatpush.bf16.msra.mxu0 %v203
    %252 = vmatpush.bf16.msra.mxu0 %v201
    %253 = vmatmul.bf16.gmra.mxu0 %v129
    %v254 = vpop.f32.mrf.mxu0
    %v255 = vadd.f32 %v149, %v254
    %v256 = vpop.f32.mrf.mxu0
    %257 = vdwg.mxu0
    %v258 = vpack.c.bf16 %v242, %v242
    %259 = vst [vmem:[#allocation6] sm:$0xf] %v258
    %v260 = vpack.c.bf16 %v255, %v255
    %261 = vst [vmem:[#allocation7] sm:$0xf] %v260
    %v262 = vld [vmem:[%s7] sm:$0x1]
    %v263 = vld [vmem:[#allocation2] sm:$0x1]
    %265 = vset.pattern.permute.xlu0 0
    %266 = vperm.xlu0 %265, %v263
    %v267 = vpop.permute.xlu0 %266
    %v269 = vperm.slane %v267, 0
    %270 = vmatpush.xpose.msra.mxu0 0.0
    %271 = vmatpush.xpose.msra.mxu0 0.0
    %272 = vmatpush.xpose.msra.mxu0 0.0
    %273 = vmatpush.xpose.msra.mxu0 0.0
    %274 = vmatpush.xpose.msra.mxu0 0.0
    %275 = vmatpush.xpose.msra.mxu0 0.0
    %276 = vmatpush.xpose.msra.mxu0 0.0
    %277 = vmatpush.xpose.msra.mxu0 0.0
    %278 = vmatpush.xpose.msra.mxu0 0.0
    %279 = vmatpush.xpose.msra.mxu0 0.0
    %280 = vmatpush.xpose.msra.mxu0 0.0
    %281 = vmatpush.xpose.msra.mxu0 0.0
    %282 = vmatpush.xpose.msra.mxu0 0.0
    %283 = vmatpush.xpose.msra.mxu0 0.0
    %284 = vmatpush.xpose.msra.mxu0 0.0
    %285 = vmatpush.xpose.msra.mxu0 %v128
    %286 = vmatmul.f32.gmra.mxu0 %v262
    %v287 = vpop.f32.mrf.mxu0
    %v288 = vadd.f32 %v269, %v287
    %289 = vdwg.mxu0
    %vm290 = vcmask 57344
    %291 = vst.msk [vmem:[#allocation9] sm:$0x1] %vm290, %v288
    // Predicated region
    $region42: #{tpu_custom_call.1} parent=1 // pred_check
      _
    $region43: #{tpu_custom_call.1} parent=1 // pred_check_branch
      %293 = sbr.rel (0) target = $region45
    $region44: #{tpu_custom_call.1} parent=1 // pred_region
      %295 = vsyncadd [#allocation5], 0
      %s297 = sshll.u32 [#allocation6], 4
      %s298 = int_to_ptr.vmem [resolvable:$true] %s297
      %s299 = sshll.u32 %s9, 4
      %s300 = int_to_ptr.hbm [resolvable:$true] %s299
      %302 = dma.vmem_to_hbm [thread:$0]  %s298, 64, %s300, [#allocation5]
    $region45: #{tpu_custom_call.1} parent=1 // pred_fallthru
      _
    // Predicated region
    $region46: #{tpu_custom_call.1} parent=1 // pred_check
      _
    $region47: #{tpu_custom_call.1} parent=1 // pred_check_branch
      %304 = sbr.rel (0) target = $region49
    $region48: #{tpu_custom_call.1} parent=1 // pred_region
      %306 = vsyncadd [#allocation8], 0
      %s308 = sshll.u32 [#allocation7], 4
      %s309 = int_to_ptr.vmem [resolvable:$true] %s308
      %s310 = sshll.u32 %s10, 4
      %s311 = int_to_ptr.hbm [resolvable:$true] %s310
      %313 = dma.vmem_to_hbm [thread:$0]  %s309, 64, %s311, [#allocation8]
    $region49: #{tpu_custom_call.1} parent=1 // pred_fallthru
      _
    // Predicated region
    $region50: #{tpu_custom_call.1} parent=1 // pred_check
      _
    $region51: #{tpu_custom_call.1} parent=1 // pred_check_branch
      %315 = sbr.rel (0) target = $region53
    $region52: #{tpu_custom_call.1} parent=1 // pred_region
      %317 = vsyncadd [#allocation8], 0
      %s319 = sshll.u32 [#allocation9], 4
      %s320 = int_to_ptr.vmem [resolvable:$true] %s319
      %s321 = sshll.u32 %s11, 4
      %s322 = int_to_ptr.hbm [resolvable:$true] %s321
      %324 = dma.vmem_to_hbm [thread:$0]  %s320, 16, %s322, [#allocation8]
    $region53: #{tpu_custom_call.1} parent=1 // pred_fallthru
      _
    // Predicated region
    $region54: #{tpu_custom_call.1} parent=1 // pred_check
      _
    $region55: #{tpu_custom_call.1} parent=1 // pred_check_branch
      %326 = sbr.rel (0) target = $region57
    $region56: #{tpu_custom_call.1} parent=1 // pred_region
      %328 = dma.done [#allocation5], 64
    $region57: #{tpu_custom_call.1} parent=1 // pred_fallthru
      _
    // Predicated region
    $region58: #{tpu_custom_call.1} parent=1 // pred_check
      _
    $region59: #{tpu_custom_call.1} parent=1 // pred_check_branch
      %330 = sbr.rel (0) target = $region61
    $region60: #{tpu_custom_call.1} parent=1 // pred_region
      %332 = dma.done [#allocation8], 64
    $region61: #{tpu_custom_call.1} parent=1 // pred_fallthru
      _
    // Predicated region
    $region62: #{tpu_custom_call.1} parent=1 // pred_check
      _
    $region63: #{tpu_custom_call.1} parent=1 // pred_check_branch
      %334 = sbr.rel (0) target = $region65
    $region64: #{tpu_custom_call.1} parent=1 // pred_region
      %336 = dma.done [#allocation8], 16
    $region65: #{tpu_custom_call.1} parent=1 // pred_fallthru
      _
    %337 = vsyncpa [#allocation4], 1
    %338 = vsyncpa [#allocation5], 1
    %339 = vsyncpa [#allocation8], 1

</llo_original>
